<compile_context>
chip_gen: v6e
topology: v6e:2x2x1
jax: 0.10.0
libtpu: 0.0.40
codegen_flags: <defaults>
</compile_context>

<pallas_src>
import functools

import jax
import jax.numpy as jnp
from jax import lax
from jax.experimental import pallas as pl
from jax.experimental.pallas import tpu as pltpu

FEAT = 384      # encoder output dim, matches nn.Linear(384, 1)
TB_MAX = 128    # batch rows per grid step: one full lane-dense (1, 128) output tile


def _stage2_kernel(ids_ref, table_ref, w_ref, b_ref, o_ref, pooled_ref, *, seq):
    # ids_ref   : SMEM (B*S,)  int32 -- flat token ids (scalar-prefetched)
    # table_ref : VMEM (V, F)  f32   -- embedding table, resident across grid steps
    # w_ref     : VMEM (1, F)  f32   -- bc weight, nn.Linear native (lane-major) layout
    # b_ref     : SMEM (1, 1)  f32   -- bc bias
    # o_ref     : VMEM (1, TB) f32   -- lane-dense logits tile for this grid step
    # pooled_ref: VMEM (TB, F) f32   -- scratch: sum-pooled encodings of the tile
    tb = pooled_ref.shape[0]
    feat = pooled_ref.shape[1]
    vocab = table_ref.shape[0]
    inv_s = 1.0 / seq
    tile_base = pl.program_id(0) * tb            # first batch row of this tile

    def row_body(r, carry):
        row_base = (tile_base + r) * seq         # flat offset of this row's tokens

        # Fused gather + sum-pool over the sequence; the (1, F) accumulator stays
        # in vregs, so no (B, S, F) intermediate ever exists.
        def tok_body(s, acc):
            tok = ids_ref[row_base + s]                       # scalar SMEM read
            tok = jnp.clip(tok, 0, vocab - 1)                 # guard VMEM OOB reads
            return acc + table_ref[pl.ds(tok, 1), :]          # (1, F) dynamic row load

        acc = lax.fori_loop(0, seq, tok_body,
                            jnp.zeros((1, feat), jnp.float32),
                            unroll=min(seq, 8))
        pooled_ref[pl.ds(r, 1), :] = acc
        return carry

    lax.fori_loop(0, tb, row_body, 0)

    # bc(mean_pool(.)): one MXU matmul for the whole tile, contracting F directly
    # against the nn.Linear weight in its native (1, F) layout -> the result is
    # already a lane-dense (1, TB) row; the 1/S of the mean is folded in here.
    logits = lax.dot_general(
        w_ref[...], pooled_ref[...],
        dimension_numbers=(((1,), (1,)), ((), ())),
        preferred_element_type=jnp.float32,
    )                                                         # (1, TB)
    o_ref[...] = (logits * inv_s + b_ref[0, 0]).astype(o_ref.dtype)


def stage2_forward(token_ids, embed_table, bc_w, bc_b):
    """token_ids: (B, S) int32, embed_table: (V, FEAT) f32,
       bc_w: (1, FEAT) f32 (nn.Linear weight layout), bc_b: (1, 1) f32  ->  (B, 1) f32"""
    # TODO(synk): the real transformer backbone inside model.encode is not reproduced;
    # it is stood in for by an embedding lookup + mean-pool (the part fused below).
    B, S = token_ids.shape
    V, F = embed_table.shape
    assert F == FEAT and F % 128 == 0

    tb = B if B < TB_MAX else TB_MAX
    assert B % tb == 0, "batch must be a multiple of the batch tile"
    grid = (B // tb,)

    ids_flat = token_ids.reshape(-1).astype(jnp.int32)   # 1-D SMEM: no 128-lane padding
    table = embed_table.astype(jnp.float32)
    w = bc_w.astype(jnp.float32).reshape(1, F)
    b = jnp.asarray(bc_b, jnp.float32).reshape(1, 1)

    # The pipeline double-buffers the table even with a constant index_map; size the
    # scoped-VMEM limit from the real footprint (+ scratch / headroom) instead of a
    # fixed 32 MiB.  Realistic vocabs on v7x should use an HBM-resident table instead.
    table_vmem = 2 * V * F * 4
    vmem_limit = int(min(max(32 << 20, table_vmem + (8 << 20)), 100 << 20))

    out = pl.pallas_call(
        functools.partial(_stage2_kernel, seq=S),
        out_shape=jax.ShapeDtypeStruct((1, B), jnp.float32),
        grid_spec=pltpu.PrefetchScalarGridSpec(
            num_scalar_prefetch=1,        # flat token ids -> SMEM before the grid runs
            grid=grid,
            in_specs=[
                # embedding table: constant block index -> DMA'd once, VMEM-resident
                pl.BlockSpec((V, F), lambda i, ids: (0, 0)),
                # bc weight, lane-major (1, 384): resident across all grid steps
                pl.BlockSpec((1, F), lambda i, ids: (0, 0)),
                # bc bias: scalar in SMEM
                pl.BlockSpec(memory_space=pltpu.MemorySpace.SMEM),
            ],
            # lane-dense output: each grid step writes one unmasked (1, TB) row tile
            out_specs=pl.BlockSpec((1, tb), lambda i, ids: (0, i)),
            scratch_shapes=[pltpu.VMEM((tb, F), jnp.float32)],
        ),
        compiler_params=pltpu.CompilerParams(
            # batch tiles are independent -> shard across both TensorCores on v7x
            # (each TC then holds its own copy of the resident table; acceptable as
            # long as per-tile compute dominates the one-time table DMA).
            dimension_semantics=("parallel",),
            vmem_limit_bytes=vmem_limit,
        ),
    )(ids_flat, table, w, b)
    return out.reshape(B, 1)


if __name__ == "__main__":
    key = jax.random.PRNGKey(0)
    k_tok, k_emb, k_w, k_b = jax.random.split(key, 4)

    B, S, V = 256, 8, 64   # small synthetic shapes; B = 2 batch tiles of 128

    token_ids = jax.random.randint(k_tok, (B, S), 0, V, dtype=jnp.int32)
    embed_table = jax.random.normal(k_emb, (V, FEAT), dtype=jnp.float32) * 0.02
    # nn.Linear(384, 1): weight (1, 384) kept in native lane-major layout, bias (1, 1).
    bc_w = jax.random.normal(k_w, (1, FEAT), dtype=jnp.float32) * 0.05
    bc_b = jax.random.normal(k_b, (1, 1), dtype=jnp.float32)

    out = stage2_forward(token_ids, embed_table, bc_w, bc_b)
    out = jax.block_until_ready(out)

    # plain-JAX reference: embed -> mean-pool -> Linear(384, 1)
    emb = jnp.take(embed_table, token_ids, axis=0)        # (B, S, FEAT)
    pooled = emb.mean(axis=1)                             # (B, FEAT)
    ref = pooled @ bc_w.T + bc_b[0, 0]                    # (B, 1)

    assert out.shape == (B, 1)
    assert jnp.allclose(out, ref, atol=1e-3, rtol=1e-3), float(jnp.abs(out - ref).max())

    print("KERNEL_OK")
</pallas_src>

<mosaic_0001>
module attributes {stable_mosaic.version = 11 : i64} {
  func.func @_stage2_kernel(%arg0: i32, %arg1: memref<2048xi32, #tpu.memory_space<smem>>, %arg2: memref<64x384xf32, #tpu.memory_space<vmem>>, %arg3: memref<1x384xf32, #tpu.memory_space<vmem>>, %arg4: memref<1x1xf32, #tpu.memory_space<smem>>, %arg5: memref<1x128xf32, #tpu.memory_space<vmem>>, %arg6: memref<128x384xf32, #tpu.memory_space<vmem>>) attributes {dimension_semantics = [#tpu.dimension_semantics<parallel>], iteration_bounds = array<i64: 2>, scalar_prefetch = 1 : i64, scratch_operands = 1 : i64, tpu.core_type = #tpu.core_type<tc>, window_params = [{pipeline_mode = #tpu.pipeline_mode<synchronous>, transform_indices = @transform_0, window_bounds = array<i64: 64, 384>}, {pipeline_mode = #tpu.pipeline_mode<synchronous>, transform_indices = @transform_1, window_bounds = array<i64: 1, 384>}, {transform_indices = @transform_2, window_bounds = array<i64: 1, 1>}, {transform_indices = @transform_3, window_bounds = array<i64: 1, 128>}]} {
    %c128_i32 = arith.constant 128 : i32
    %0 = arith.muli %arg0, %c128_i32 : i32
    %c0_i32 = arith.constant 0 : i32
    %c128_i32_0 = arith.constant 128 : i32
    %1 = arith.addi %c0_i32, %c128_i32_0 : i32
    %c1_i32 = arith.constant 1 : i32
    scf.for %arg7 = %c0_i32 to %1 step %c1_i32  : i32 {
      %11 = arith.addi %0, %arg7 : i32
      %c8_i32 = arith.constant 8 : i32
      %12 = arith.muli %11, %c8_i32 : i32
      %cst_10 = arith.constant 0.000000e+00 : f32
      %13 = vector.broadcast %cst_10 : f32 to vector<1x384xf32>
      %c0_i32_11 = arith.constant 0 : i32
      %14 = arith.addi %12, %c0_i32_11 : i32
      %15 = arith.index_cast %14 : i32 to index
      %16 = memref.load %arg1[%15] : memref<2048xi32, #tpu.memory_space<smem>>
      %c0_i32_12 = arith.constant 0 : i32
      %c63_i32 = arith.constant 63 : i32
      %17 = arith.maxsi %c0_i32_12, %16 : i32
      %18 = arith.minsi %c63_i32, %17 : i32
      %19 = arith.index_cast %18 : i32 to index
      %c0_13 = arith.constant 0 : index
      %20 = vector.load %arg2[%19, %c0_13] : memref<64x384xf32, #tpu.memory_space<vmem>>, vector<1x384xf32>
      %21 = arith.addf %13, %20 : vector<1x384xf32>
      %c1_i32_14 = arith.constant 1 : i32
      %22 = arith.addi %12, %c1_i32_14 : i32
      %23 = arith.index_cast %22 : i32 to index
      %24 = memref.load %arg1[%23] : memref<2048xi32, #tpu.memory_space<smem>>
      %c0_i32_15 = arith.constant 0 : i32
      %c63_i32_16 = arith.constant 63 : i32
      %25 = arith.maxsi %c0_i32_15, %24 : i32
      %26 = arith.minsi %c63_i32_16, %25 : i32
      %27 = arith.index_cast %26 : i32 to index
      %c0_17 = arith.constant 0 : index
      %28 = vector.load %arg2[%27, %c0_17] : memref<64x384xf32, #tpu.memory_space<vmem>>, vector<1x384xf32>
      %29 = arith.addf %21, %28 : vector<1x384xf32>
      %c2_i32 = arith.constant 2 : i32
      %30 = arith.addi %12, %c2_i32 : i32
      %31 = arith.index_cast %30 : i32 to index
      %32 = memref.load %arg1[%31] : memref<2048xi32, #tpu.memory_space<smem>>
      %c0_i32_18 = arith.constant 0 : i32
      %c63_i32_19 = arith.constant 63 : i32
      %33 = arith.maxsi %c0_i32_18, %32 : i32
      %34 = arith.minsi %c63_i32_19, %33 : i32
      %35 = arith.index_cast %34 : i32 to index
      %c0_20 = arith.constant 0 : index
      %36 = vector.load %arg2[%35, %c0_20] : memref<64x384xf32, #tpu.memory_space<vmem>>, vector<1x384xf32>
      %37 = arith.addf %29, %36 : vector<1x384xf32>
      %c3_i32 = arith.constant 3 : i32
      %38 = arith.addi %12, %c3_i32 : i32
      %39 = arith.index_cast %38 : i32 to index
      %40 = memref.load %arg1[%39] : memref<2048xi32, #tpu.memory_space<smem>>
      %c0_i32_21 = arith.constant 0 : i32
      %c63_i32_22 = arith.constant 63 : i32
      %41 = arith.maxsi %c0_i32_21, %40 : i32
      %42 = arith.minsi %c63_i32_22, %41 : i32
      %43 = arith.index_cast %42 : i32 to index
      %c0_23 = arith.constant 0 : index
      %44 = vector.load %arg2[%43, %c0_23] : memref<64x384xf32, #tpu.memory_space<vmem>>, vector<1x384xf32>
      %45 = arith.addf %37, %44 : vector<1x384xf32>
      %c4_i32 = arith.constant 4 : i32
      %46 = arith.addi %12, %c4_i32 : i32
      %47 = arith.index_cast %46 : i32 to index
      %48 = memref.load %arg1[%47] : memref<2048xi32, #tpu.memory_space<smem>>
      %c0_i32_24 = arith.constant 0 : i32
      %c63_i32_25 = arith.constant 63 : i32
      %49 = arith.maxsi %c0_i32_24, %48 : i32
      %50 = arith.minsi %c63_i32_25, %49 : i32
      %51 = arith.index_cast %50 : i32 to index
      %c0_26 = arith.constant 0 : index
      %52 = vector.load %arg2[%51, %c0_26] : memref<64x384xf32, #tpu.memory_space<vmem>>, vector<1x384xf32>
      %53 = arith.addf %45, %52 : vector<1x384xf32>
      %c5_i32 = arith.constant 5 : i32
      %54 = arith.addi %12, %c5_i32 : i32
      %55 = arith.index_cast %54 : i32 to index
      %56 = memref.load %arg1[%55] : memref<2048xi32, #tpu.memory_space<smem>>
      %c0_i32_27 = arith.constant 0 : i32
      %c63_i32_28 = arith.constant 63 : i32
      %57 = arith.maxsi %c0_i32_27, %56 : i32
      %58 = arith.minsi %c63_i32_28, %57 : i32
      %59 = arith.index_cast %58 : i32 to index
      %c0_29 = arith.constant 0 : index
      %60 = vector.load %arg2[%59, %c0_29] : memref<64x384xf32, #tpu.memory_space<vmem>>, vector<1x384xf32>
      %61 = arith.addf %53, %60 : vector<1x384xf32>
      %c6_i32 = arith.constant 6 : i32
      %62 = arith.addi %12, %c6_i32 : i32
      %63 = arith.index_cast %62 : i32 to index
      %64 = memref.load %arg1[%63] : memref<2048xi32, #tpu.memory_space<smem>>
      %c0_i32_30 = arith.constant 0 : i32
      %c63_i32_31 = arith.constant 63 : i32
      %65 = arith.maxsi %c0_i32_30, %64 : i32
      %66 = arith.minsi %c63_i32_31, %65 : i32
      %67 = arith.index_cast %66 : i32 to index
      %c0_32 = arith.constant 0 : index
      %68 = vector.load %arg2[%67, %c0_32] : memref<64x384xf32, #tpu.memory_space<vmem>>, vector<1x384xf32>
      %69 = arith.addf %61, %68 : vector<1x384xf32>
      %c7_i32 = arith.constant 7 : i32
      %70 = arith.addi %12, %c7_i32 : i32
      %71 = arith.index_cast %70 : i32 to index
      %72 = memref.load %arg1[%71] : memref<2048xi32, #tpu.memory_space<smem>>
      %c0_i32_33 = arith.constant 0 : i32
      %c63_i32_34 = arith.constant 63 : i32
      %73 = arith.maxsi %c0_i32_33, %72 : i32
      %74 = arith.minsi %c63_i32_34, %73 : i32
      %75 = arith.index_cast %74 : i32 to index
      %c0_35 = arith.constant 0 : index
      %76 = vector.load %arg2[%75, %c0_35] : memref<64x384xf32, #tpu.memory_space<vmem>>, vector<1x384xf32>
      %77 = arith.addf %69, %76 : vector<1x384xf32>
      %c8_i32_36 = arith.constant 8 : i32
      %78 = arith.index_cast %arg7 : i32 to index
      %c0_37 = arith.constant 0 : index
      %79 = vector.load %arg6[%78, %c0_37] : memref<128x384xf32, #tpu.memory_space<vmem>>, vector<1x384xf32>
      tpu.vector_store %arg6[%78, %c0_37], %77 {strides = array<i32>} : memref<128x384xf32, #tpu.memory_space<vmem>>, vector<1x384xf32>,
    }
    %c128_i32_1 = arith.constant 128 : i32
    %c0 = arith.constant 0 : index
    %c0_2 = arith.constant 0 : index
    %2 = vector.load %arg3[%c0, %c0_2] : memref<1x384xf32, #tpu.memory_space<vmem>>, vector<1x384xf32>
    %c0_3 = arith.constant 0 : index
    %c0_4 = arith.constant 0 : index
    %3 = vector.load %arg6[%c0_3, %c0_4] : memref<128x384xf32, #tpu.memory_space<vmem>>, vector<128x384xf32>
    %cst = arith.constant dense<0.000000e+00> : vector<1x128xf32>
    %4 = tpu.matmul %2, %3, %cst {dimension_numbers = #tpu.dot_dimension_numbers<[1], [1], [0], [0], [0, 0, 1, 0], [], []>} : vector<1x384xf32>, vector<128x384xf32>, vector<1x128xf32> -> vector<1x128xf32>
    %cst_5 = arith.constant 1.250000e-01 : f32
    %5 = vector.broadcast %cst_5 : f32 to vector<1x128xf32>
    %6 = arith.mulf %4, %5 : vector<1x128xf32>
    %c0_6 = arith.constant 0 : index
    %c0_7 = arith.constant 0 : index
    %7 = memref.load %arg4[%c0_6, %c0_7] : memref<1x1xf32, #tpu.memory_space<smem>>
    %8 = vector.broadcast %7 : f32 to vector<1x128xf32>
    %9 = arith.addf %6, %8 : vector<1x128xf32>
    %c0_8 = arith.constant 0 : index
    %c0_9 = arith.constant 0 : index
    %10 = vector.load %arg5[%c0_8, %c0_9] : memref<1x128xf32, #tpu.memory_space<vmem>>, vector<1x128xf32>
    tpu.vector_store %arg5[%c0_8, %c0_9], %9 {strides = array<i32>} : memref<1x128xf32, #tpu.memory_space<vmem>>, vector<1x128xf32>,
    return
  }
  func.func @transform_0(%arg0: i32, %arg1: memref<2048xi32, #tpu.memory_space<smem>>) -> (i32, i32) {
    %c0_i32 = arith.constant 0 : i32
    %c0_i32_0 = arith.constant 0 : i32
    %c0_i32_1 = arith.constant 0 : i32
    return %c0_i32, %c0_i32_0 : i32, i32
  }
  func.func @transform_1(%arg0: i32, %arg1: memref<2048xi32, #tpu.memory_space<smem>>) -> (i32, i32) {
    %c0_i32 = arith.constant 0 : i32
    %c0_i32_0 = arith.constant 0 : i32
    %c0_i32_1 = arith.constant 0 : i32
    return %c0_i32, %c0_i32_0 : i32, i32
  }
  func.func @transform_2(%arg0: i32, %arg1: memref<2048xi32, #tpu.memory_space<smem>>) -> (i32, i32) {
    %c0_i32 = arith.constant 0 : i32
    %c0_i32_0 = arith.constant 0 : i32
    %c0_i32_1 = arith.constant 0 : i32
    return %c0_i32, %c0_i32_0 : i32, i32
  }
  func.func @transform_3(%arg0: i32, %arg1: memref<2048xi32, #tpu.memory_space<smem>>) -> (i32, i32) {
    %c0_i32 = arith.constant 0 : i32
    %c0_i32_0 = arith.constant 0 : i32
    return %c0_i32, %arg0 : i32, i32
  }
}

</mosaic_0001>

<llo_original>
// kernel: tpu_custom_call.1
$region0: #{tpu_custom_call.1}
  #allocation0 [shape = 'u32[]', space=smem, size = 0x4, offset = 0x4, fixed_abs, tag = 'smem constant byte address 0x4 - core index']
  #allocation1 [shape = 'u32[144,128]{1,0:T(1,128)}', space=vmem, size = 0x12000, scoped, tag = 'internal scratch']
  #allocation2 [shape = 'f32[128,384]{1,0:T(8,128)}', space=vmem, size = 0x30000, scoped, tag = 'scratch operand']
  #allocation3 [shape = 's32[1]{0}', space=sflag, size = 0x4, scoped, tag = 'scoped memory for tpu_custom_call.1']
  #allocation4 [shape = 'u8[8192]{0}', space=smem, size = 0x2000, scoped, tag = 'prefetched SMEM operand 0']
  #allocation5 [shape = 'f32[1,1]{1,0:T(1,128)S(6)}', space=smem, size = 0x200, scoped, tag = 'scoped memory for tpu_custom_call.1']
  %s0 = inlined_call_operand.hbm [shape: s32[2048], index: 0, kind: input, shape index: {}]
  %s1 = inlined_call_operand.hbm [shape: f32[64,384], index: 1, kind: input, shape index: {}]
  %s2 = inlined_call_operand.vmem [shape: f32[1,384], index: 2, kind: input, shape index: {}]
  %s3 = inlined_call_operand.<no memory space> [shape: f32[1,1], index: 3, kind: input, shape index: {}]
  %s4 = inlined_call_operand.hbm [shape: f32[1,256], index: 4, kind: output, shape index: {}]
  %s5 = sld [smem:[#allocation0]]
  $region56: #{tpu_custom_call.1} parent=0
    _
  %s7 = ssub.s32 1, %s5
  %s8 = scalar_select 0, %s7, %s5
  %10 = dma.hbm_to_smem %s0, 256, [#allocation4], [#allocation3]
  %11 = sst [smem:[#allocation5]] %s3
  %12 = dma.done [#allocation3], 256
  %13 = sfence
  $region1: #{tpu_custom_call.1} parent=0
    #allocation6 [shape = 'u8[98304]{0}', space=vmem, size = 0x18000, scoped, tag = 'input window, operand 1, single buffered']
    #allocation7 [shape = 's32[2]{0}', space=sflag, size = 0x8, scoped, tag = 'scoped memory for tpu_custom_call.1']
    #allocation8 [shape = 's32[2]{0}', space=sflag, size = 0x8, scoped, tag = 'scoped memory for tpu_custom_call.1']
    #allocation9 [shape = 'u8[1024]{0}', space=vmem, size = 0x400, scoped, tag = 'output window, operand 0']
    %14 = vsyncpa [#allocation7], 0
    %15 = vsyncpa [#allocation8], 0
    %s16 = scalar_lea.sflag [#allocation8], 1
    %17 = vsyncpa %s16, 0
    loop: start=0, step=1, limit=4
    $region2: #{tpu_custom_call.1} parent=1 // loop_pre_header
      _
    $region3: #{tpu_custom_call.1} parent=1 // loop_header
      %s19 = sphi 0, %s23
      %p20 = scmp.ge.s32.totalorder %s19, 4
      %s27 = sphi 0, %s27
      %s29 = sphi 0, %s27
      %s30 = sphi 0, %s29
      %s44 = sphi 0, %s30
      %s48 = sphi 0, %s48
      %s50 = sphi 0, %s48
      %s51 = sphi 0, %s50
      %s65 = sphi 0, %s51
      %s69 = sphi 0, %s69
      %s71 = sphi 0, %s69
      %s72 = sphi 0, %s71
      %s86 = sphi 0, %s72
      %s92 = sphi 0, %s94
      %s95 = sphi 0, %s92
      %s96 = sphi 0, %s95
      %s112 = sphi 0, %s96
    $region4: #{tpu_custom_call.1} parent=1 // loop_header_branch
      %22 = sbr.rel (%p20) target = $region8
    $region5: #{tpu_custom_call.1} parent=1 // loop_body
      %s24 = ssub.s32 %s19, 1
      %s25 = ssub.s32 %s19, 2
      %s26 = sadd.s32 %s19, 1
      %s28 = sadd.s32 %s27, 1
      %p31 = scmp.eq.s32.totalorder %s19, 1
      %p32 = scmp.ne.s32.totalorder %s27, %s29
      %p33 = scmp.eq.s32.totalorder %s19, 0
      %p34 = por %p32, %p33
      %p35 = scmp.ne.s32.totalorder %s27, %s29
      %p36 = scmp.eq.s32.totalorder %s24, 1
      %p37 = por %p35, %p36
      %p38 = scmp.ne.s32.totalorder %s29, %s30
      %p39 = scmp.eq.s32.totalorder %s24, 0
      %p40 = por %p38, %p39
      %p41 = scmp.ne.s32.totalorder %s29, %s30
      %p42 = scmp.eq.s32.totalorder %s25, 1
      %p43 = por %p41, %p42
      %p45 = scmp.ne.s32.totalorder %s30, %s44
      %p46 = scmp.eq.s32.totalorder %s25, 0
      %p47 = por %p45, %p46
      %s49 = sadd.s32 %s48, 1
      %p52 = scmp.eq.s32.totalorder %s19, 1
      %p53 = scmp.ne.s32.totalorder %s48, %s50
      %p54 = scmp.eq.s32.totalorder %s19, 0
      %p55 = por %p53, %p54
      %p56 = scmp.ne.s32.totalorder %s48, %s50
      %p57 = scmp.eq.s32.totalorder %s24, 1
      %p58 = por %p56, %p57
      %p59 = scmp.ne.s32.totalorder %s50, %s51
      %p60 = scmp.eq.s32.totalorder %s24, 0
      %p61 = por %p59, %p60
      %p62 = scmp.ne.s32.totalorder %s50, %s51
      %p63 = scmp.eq.s32.totalorder %s25, 1
      %p64 = por %p62, %p63
      %p66 = scmp.ne.s32.totalorder %s51, %s65
      %p67 = scmp.eq.s32.totalorder %s25, 0
      %p68 = por %p66, %p67
      %s70 = sadd.s32 %s69, 1
      %p73 = scmp.eq.s32.totalorder %s19, 1
      %p74 = scmp.ne.s32.totalorder %s69, %s71
      %p75 = scmp.eq.s32.totalorder %s19, 0
      %p76 = por %p74, %p75
      %p77 = scmp.ne.s32.totalorder %s69, %s71
      %p78 = scmp.eq.s32.totalorder %s24, 1
      %p79 = por %p77, %p78
      %p80 = scmp.ne.s32.totalorder %s71, %s72
      %p81 = scmp.eq.s32.totalorder %s24, 0
      %p82 = por %p80, %p81
      %p83 = scmp.ne.s32.totalorder %s71, %s72
      %p84 = scmp.eq.s32.totalorder %s25, 1
      %p85 = por %p83, %p84
      %p87 = scmp.ne.s32.totalorder %s72, %s86
      %p88 = scmp.eq.s32.totalorder %s25, 0
      %p89 = por %p87, %p88
      %s90 = ssub.s32 %s19, %s26
      %p91 = scmp.eq.s32.totalorder %s90, 0
      %s93 = sadd.s32 %s92, 1
      %s94 = scalar_select %p91, %s92, %s93
      %p97 = pneg %p91
      %p98 = scmp.eq.s32.totalorder %s19, 1
      %p99 = por %p97, %p98
      %p100 = scmp.ne.s32.totalorder %s92, %s95
      %p101 = scmp.eq.s32.totalorder %s19, 0
      %p102 = por %p100, %p101
      %p103 = scmp.ne.s32.totalorder %s92, %s95
      %p104 = scmp.eq.s32.totalorder %s24, 1
      %p105 = por %p103, %p104
      %p106 = scmp.ne.s32.totalorder %s95, %s96
      %p107 = scmp.eq.s32.totalorder %s24, 0
      %p108 = por %p106, %p107
      %p109 = scmp.ne.s32.totalorder %s95, %s96
      %p110 = scmp.eq.s32.totalorder %s25, 1
      %p111 = por %p109, %p110
      %p113 = scmp.ne.s32.totalorder %s96, %s112
      %p114 = scmp.eq.s32.totalorder %s25, 0
      %p115 = por %p113, %p114
      %p116 = scmp.le.s32.totalorder 1, %s19
      %p117 = scmp.lt.s32.totalorder %s19, 3
      %p118 = pnand %p116, %p117
      %p119 = pneg %p118
      // Predicated region
      $region9: #{tpu_custom_call.1} parent=5 // pred_check
        _
      $region10: #{tpu_custom_call.1} parent=5 // pred_check_branch
        %121 = sbr.rel (%p118) target = $region12
      $region11: #{tpu_custom_call.1} parent=5 // pred_region
        %s122 = ssub.s32 %s19, 1
        // Predicated region
        $region13: #{tpu_custom_call.1} parent=11 // pred_check
          %p123 = pneg %p40
        $region14: #{tpu_custom_call.1} parent=11 // pred_check_branch
          %125 = sbr.rel (%p123) target = $region16
        $region15: #{tpu_custom_call.1} parent=11 // pred_region
          %s127 = ssub.s32 3072, 3072
          %128 = vsyncadd [#allocation7], %s127
          %s129 = sshll.u32 [#allocation6], 4
          %s130 = int_to_ptr.vmem [resolvable:$true] %s129
          %135 = dma.hbm_to_vmem [thread:$0]  %s1, 3072, %s130, [#allocation7], 384, 384, 24
        $region16: #{tpu_custom_call.1} parent=11 // pred_fallthru
          _
        // Predicated region
        $region17: #{tpu_custom_call.1} parent=11 // pred_check
          %p136 = pneg %p61
        $region18: #{tpu_custom_call.1} parent=11 // pred_check_branch
          %138 = sbr.rel (%p136) target = $region20
        $region19: #{tpu_custom_call.1} parent=11 // pred_region
          _
        $region20: #{tpu_custom_call.1} parent=11 // pred_fallthru
          _
        // Predicated region
        $region21: #{tpu_custom_call.1} parent=11 // pred_check
          %p139 = pneg %p82
        $region22: #{tpu_custom_call.1} parent=11 // pred_check_branch
          %141 = sbr.rel (%p139) target = $region24
        $region23: #{tpu_custom_call.1} parent=11 // pred_region
          _
        $region24: #{tpu_custom_call.1} parent=11 // pred_fallthru
          _
      $region12: #{tpu_custom_call.1} parent=5 // pred_fallthru
        _
      %p142 = scmp.lt.s32.totalorder %s19, 2
      // Predicated region
      $region25: #{tpu_custom_call.1} parent=5 // pred_check
        %p143 = pneg %p142
      $region26: #{tpu_custom_call.1} parent=5 // pred_check_branch
        %145 = sbr.rel (%p143) target = $region28
      $region27: #{tpu_custom_call.1} parent=5 // pred_region
        _
      $region28: #{tpu_custom_call.1} parent=5 // pred_fallthru
        _
      %p146 = scmp.le.s32.totalorder 1, %s19
      %p147 = scmp.lt.s32.totalorder %s19, 3
      %p148 = pnand %p146, %p147
      %p149 = pneg %p148
      // Predicated region
      $region29: #{tpu_custom_call.1} parent=5 // pred_check
        _
      $region30: #{tpu_custom_call.1} parent=5 // pred_check_branch
        %151 = sbr.rel (%p148) target = $region32
      $region31: #{tpu_custom_call.1} parent=5 // pred_region
        %s152 = ssub.s32 %s19, 1
        // Predicated region
        $region33: #{tpu_custom_call.1} parent=31 // pred_check
          %p153 = pneg %p40
        $region34: #{tpu_custom_call.1} parent=31 // pred_check_branch
          %155 = sbr.rel (%p153) target = $region36
        $region35: #{tpu_custom_call.1} parent=31 // pred_region
          %156 = dma.done [#allocation7], 3072
        $region36: #{tpu_custom_call.1} parent=31 // pred_fallthru
          _
        %p157 = pneg %p40
        %p158 = pneg %p37
        %p159 = pneg %p61
        %p160 = pneg %p58
        %p161 = pneg %p82
        %p162 = pneg %p79
        %p163 = pneg %p108
        %p164 = pneg %p105
        %s165 = sand.u32 %s95, 1
        %s166 = scalar_lea.sflag [#allocation8], %s165
        %s167 = sand.u32 %s95, 1
        %s168 = scalar_lea.vmem [#allocation9], %s167
        %s169 = smul.u32 %s24, 128
        loop: start=0, step=1, limit=128
        $region37: #{tpu_custom_call.1} parent=31 // loop_pre_header
          _
        $region38: #{tpu_custom_call.1} parent=31 // loop_header
          %s171 = sphi 0, %s175
          %p172 = scmp.ge.s32.totalorder %s171, 128
        $region39: #{tpu_custom_call.1} parent=31 // loop_header_branch
          %174 = sbr.rel (%p172) target = $region43
        $region40: #{tpu_custom_call.1} parent=31 // loop_body
          %s176 = sadd.s32 %s169, %s171
          %s177 = smul.u32 %s176, 8
          %s178 = sld [smem:[#allocation4 + %s177]]
          %p179 = scmp.gt.s32.totalorder %s178, 0
          %s180 = scalar_select %p179, %s178, 0
          %p181 = scmp.lt.s32.totalorder %s180, 63
          %s182 = scalar_select %p181, %s180, 63
          %s183 = sshra.s32 %s182, 3
          %s184 = sand.u32 %s182, 7
          %s185 = sshra.s32 %s182, 3
          %s186 = sand.u32 %s182, 7
          %s187 = smul.u32 %s183, 3
          %s188 = smul.u32 %s187, 8
          %s189 = sadd.s32 %s188, %s186
          %s190 = scalar_lea.vmem [#allocation6], %s189
          %v191 = vld [vmem:[%s190] ss:$8 sm:$0x7]
          %v192 = vadd.f32 %v191, 0.0
          %s193 = sadd.s32 %s177, 1
          %s194 = sld [smem:[#allocation4 + %s193]]
          %p195 = scmp.gt.s32.totalorder %s194, 0
          %s196 = scalar_select %p195, %s194, 0
          %p197 = scmp.lt.s32.totalorder %s196, 63
          %s198 = scalar_select %p197, %s196, 63
          %s199 = sshra.s32 %s198, 3
          %s200 = sand.u32 %s198, 7
          %s201 = sshra.s32 %s198, 3
          %s202 = sand.u32 %s198, 7
          %s203 = smul.u32 %s199, 3
          %s204 = smul.u32 %s203, 8
          %s205 = sadd.s32 %s204, %s202
          %s206 = scalar_lea.vmem [#allocation6], %s205
          %v207 = vld [vmem:[%s206] ss:$8 sm:$0x7]
          %v208 = vadd.f32 %v192, %v207
          %s209 = sadd.s32 %s177, 2
          %s210 = sld [smem:[#allocation4 + %s209]]
          %p211 = scmp.gt.s32.totalorder %s210, 0
          %s212 = scalar_select %p211, %s210, 0
          %p213 = scmp.lt.s32.totalorder %s212, 63
          %s214 = scalar_select %p213, %s212, 63
          %s215 = sshra.s32 %s214, 3
          %s216 = sand.u32 %s214, 7
          %s217 = sshra.s32 %s214, 3
          %s218 = sand.u32 %s214, 7
          %s219 = smul.u32 %s215, 3
          %s220 = smul.u32 %s219, 8
          %s221 = sadd.s32 %s220, %s218
          %s222 = scalar_lea.vmem [#allocation6], %s221
          %v223 = vld [vmem:[%s222] ss:$8 sm:$0x7]
          %v224 = vadd.f32 %v208, %v223
          %s225 = sadd.s32 %s177, 3
          %s226 = sld [smem:[#allocation4 + %s225]]
          %p227 = scmp.gt.s32.totalorder %s226, 0
          %s228 = scalar_select %p227, %s226, 0
          %p229 = scmp.lt.s32.totalorder %s228, 63
          %s230 = scalar_select %p229, %s228, 63
          %s231 = sshra.s32 %s230, 3
          %s232 = sand.u32 %s230, 7
          %s233 = sshra.s32 %s230, 3
          %s234 = sand.u32 %s230, 7
          %s235 = smul.u32 %s231, 3
          %s236 = smul.u32 %s235, 8
          %s237 = sadd.s32 %s236, %s234
          %s238 = scalar_lea.vmem [#allocation6], %s237
          %v239 = vld [vmem:[%s238] ss:$8 sm:$0x7]
          %v240 = vadd.f32 %v224, %v239
          %s241 = sadd.s32 %s177, 4
          %s242 = sld [smem:[#allocation4 + %s241]]
          %p243 = scmp.gt.s32.totalorder %s242, 0
          %s244 = scalar_select %p243, %s242, 0
          %p245 = scmp.lt.s32.totalorder %s244, 63
          %s246 = scalar_select %p245, %s244, 63
          %s247 = sshra.s32 %s246, 3
          %s248 = sand.u32 %s246, 7
          %s249 = sshra.s32 %s246, 3
          %s250 = sand.u32 %s246, 7
          %s251 = smul.u32 %s247, 3
          %s252 = smul.u32 %s251, 8
          %s253 = sadd.s32 %s252, %s250
          %s254 = scalar_lea.vmem [#allocation6], %s253
          %v255 = vld [vmem:[%s254] ss:$8 sm:$0x7]
          %v256 = vadd.f32 %v240, %v255
          %s257 = sadd.s32 %s177, 5
          %s258 = sld [smem:[#allocation4 + %s257]]
          %p259 = scmp.gt.s32.totalorder %s258, 0
          %s260 = scalar_select %p259, %s258, 0
          %p261 = scmp.lt.s32.totalorder %s260, 63
          %s262 = scalar_select %p261, %s260, 63
          %s263 = sshra.s32 %s262, 3
          %s264 = sand.u32 %s262, 7
          %s265 = sshra.s32 %s262, 3
          %s266 = sand.u32 %s262, 7
          %s267 = smul.u32 %s263, 3
          %s268 = smul.u32 %s267, 8
          %s269 = sadd.s32 %s268, %s266
          %s270 = scalar_lea.vmem [#allocation6], %s269
          %v271 = vld [vmem:[%s270] ss:$8 sm:$0x7]
          %v272 = vadd.f32 %v256, %v271
          %s273 = sadd.s32 %s177, 6
          %s274 = sld [smem:[#allocation4 + %s273]]
          %p275 = scmp.gt.s32.totalorder %s274, 0
          %s276 = scalar_select %p275, %s274, 0
          %p277 = scmp.lt.s32.totalorder %s276, 63
          %s278 = scalar_select %p277, %s276, 63
          %s279 = sshra.s32 %s278, 3
          %s280 = sand.u32 %s278, 7
          %s281 = sshra.s32 %s278, 3
          %s282 = sand.u32 %s278, 7
          %s283 = smul.u32 %s279, 3
          %s284 = smul.u32 %s283, 8
          %s285 = sadd.s32 %s284, %s282
          %s286 = scalar_lea.vmem [#allocation6], %s285
          %v287 = vld [vmem:[%s286] ss:$8 sm:$0x7]
          %v288 = vadd.f32 %v272, %v287
          %s289 = sadd.s32 %s177, 7
          %s290 = sld [smem:[#allocation4 + %s289]]
          %p291 = scmp.gt.s32.totalorder %s290, 0
          %s292 = scalar_select %p291, %s290, 0
          %p293 = scmp.lt.s32.totalorder %s292, 63
          %s294 = scalar_select %p293, %s292, 63
          %s295 = sshra.s32 %s294, 3
          %s296 = sand.u32 %s294, 7
          %s297 = sshra.s32 %s294, 3
          %s298 = sand.u32 %s294, 7
          %s299 = smul.u32 %s295, 3
          %s300 = smul.u32 %s299, 8
          %s301 = sadd.s32 %s300, %s298
          %s302 = scalar_lea.vmem [#allocation6], %s301
          %v303 = vld [vmem:[%s302] ss:$8 sm:$0x7]
          %v304 = vadd.f32 %v288, %v303
          %v305 = vlaneseq
          %vm306 = vcmp.ge.s32.totalorder %v305, 0
          %vm307 = vcmp.lt.s32.totalorder %v305, 384
          %vm308 = vmand %vm306, %vm307
          %s309 = sshra.s32 %s171, 3
          %s310 = sand.u32 %s171, 7
          %s311 = sshra.s32 %s171, 3
          %s312 = sand.u32 %s171, 7
          %s313 = smul.u32 %s309, 3
          %s314 = smul.u32 %s313, 8
          %s315 = sadd.s32 %s314, %s312
          %s316 = scalar_lea.vmem [#allocation2], %s315
          %317 = vst.msk [vmem:[%s316] ss:$8 sm:$0x7] %vm308, %v304
          %318 = vst.msk [vmem:[%s316] ss:$8 sm:$0x0] %vm308, %v304
        $region41: #{tpu_custom_call.1} parent=31 // loop_footer
          %s175 = sadd.s32 1, %s171
        $region42: #{tpu_custom_call.1} parent=31 // loop_footer_branch
          %170 = sbr.rel target = $region38
        $region43: #{tpu_custom_call.1} parent=31 // loop_exit
          _
        %v319 = vld [vmem:[%s2] sm:$0x7]
        %v320 = vld [vmem:[#allocation2] sm:$0xff]
        %v321 = vld [vmem:[#allocation2 + $0x8] sm:$0xff]
        %v322 = vld [vmem:[#allocation2 + $0x10] sm:$0xff]
        %v323 = vld [vmem:[#allocation2 + $0x18] sm:$0xff]
        %v324 = vld [vmem:[#allocation2 + $0x20] sm:$0xff]
        %v325 = vld [vmem:[#allocation2 + $0x28] sm:$0xff]
        %v326 = vld [vmem:[#allocation2 + $0x30] sm:$0xff]
        %v327 = vld [vmem:[#allocation2 + $0x38] sm:$0xff]
        %v328 = vld [vmem:[#allocation2 + $0x40] sm:$0xff]
        %v329 = vld [vmem:[#allocation2 + $0x48] sm:$0xff]
        %v330 = vld [vmem:[#allocation2 + $0x50] sm:$0xff]
        %v331 = vld [vmem:[#allocation2 + $0x58] sm:$0xff]
        %v332 = vld [vmem:[#allocation2 + $0x60] sm:$0xff]
        %v333 = vld [vmem:[#allocation2 + $0x68] sm:$0xff]
        %v334 = vld [vmem:[#allocation2 + $0x70] sm:$0xff]
        %v335 = vld [vmem:[#allocation2 + $0x78] sm:$0xff]
        %v336 = vld [vmem:[#allocation2 + $0x80] sm:$0xff]
        %v337 = vld [vmem:[#allocation2 + $0x88] sm:$0xff]
        %v338 = vld [vmem:[#allocation2 + $0x90] sm:$0xff]
        %v339 = vld [vmem:[#allocation2 + $0x98] sm:$0xff]
        %v340 = vld [vmem:[#allocation2 + $0xa0] sm:$0xff]
        %v341 = vld [vmem:[#allocation2 + $0xa8] sm:$0xff]
        %v342 = vld [vmem:[#allocation2 + $0xb0] sm:$0xff]
        %v343 = vld [vmem:[#allocation2 + $0xb8] sm:$0xff]
        %v344 = vld [vmem:[#allocation2 + $0xc0] sm:$0xff]
        %v345 = vld [vmem:[#allocation2 + $0xc8] sm:$0xff]
        %v346 = vld [vmem:[#allocation2 + $0xd0] sm:$0xff]
        %v347 = vld [vmem:[#allocation2 + $0xd8] sm:$0xff]
        %v348 = vld [vmem:[#allocation2 + $0xe0] sm:$0xff]
        %v349 = vld [vmem:[#allocation2 + $0xe8] sm:$0xff]
        %v350 = vld [vmem:[#allocation2 + $0xf0] sm:$0xff]
        %v351 = vld [vmem:[#allocation2 + $0xf8] sm:$0xff]
        %v352 = vld [vmem:[#allocation2 + $0x100] sm:$0xff]
        %v353 = vld [vmem:[#allocation2 + $0x108] sm:$0xff]
        %v354 = vld [vmem:[#allocation2 + $0x110] sm:$0xff]
        %v355 = vld [vmem:[#allocation2 + $0x118] sm:$0xff]
        %v356 = vld [vmem:[#allocation2 + $0x120] sm:$0xff]
        %v357 = vld [vmem:[#allocation2 + $0x128] sm:$0xff]
        %v358 = vld [vmem:[#allocation2 + $0x130] sm:$0xff]
        %v359 = vld [vmem:[#allocation2 + $0x138] sm:$0xff]
        %v360 = vld [vmem:[#allocation2 + $0x140] sm:$0xff]
        %v361 = vld [vmem:[#allocation2 + $0x148] sm:$0xff]
        %v362 = vld [vmem:[#allocation2 + $0x150] sm:$0xff]
        %v363 = vld [vmem:[#allocation2 + $0x158] sm:$0xff]
        %v364 = vld [vmem:[#allocation2 + $0x160] sm:$0xff]
        %v365 = vld [vmem:[#allocation2 + $0x168] sm:$0xff]
        %v366 = vld [vmem:[#allocation2 + $0x170] sm:$0xff]
        %v367 = vld [vmem:[#allocation2 + $0x178] sm:$0xff]
        %v369 = vlaneseq
        %v370 = vshrl.u32 %v369, 7
        %v371 = vsub.s32 0, %v370
        %v372 = vrot.slane %v319, %v371
        %v373 = vlaneseq
        %v374 = vshrl.u32 %v373, 7
        %v375 = vsub.s32 1, %v374
        %v376 = vrot.slane %v319, %v375
        %v377 = vlaneseq
        %v378 = vshrl.u32 %v377, 7
        %v379 = vsub.s32 2, %v378
        %v380 = vrot.slane %v319, %v379
        %384 = vmatprep.subr.mxu0 %v366
        %385 = vmatpush1.xpose.msra.mxu0 %v365
        %386 = vmatprep.subr.mxu0 %v363
        %387 = vmatpush1.xpose.msra.mxu0 %v362
        %388 = vmatprep.subr.mxu0 %v360
        %389 = vmatpush1.xpose.msra.mxu0 %v359
        %390 = vmatprep.subr.mxu0 %v357
        %391 = vmatpush1.xpose.msra.mxu0 %v356
        %392 = vmatprep.subr.mxu0 %v354
        %393 = vmatpush1.xpose.msra.mxu0 %v353
        %394 = vmatprep.subr.mxu0 %v351
        %395 = vmatpush1.xpose.msra.mxu0 %v350
        %396 = vmatprep.subr.mxu0 %v348
        %397 = vmatpush1.xpose.msra.mxu0 %v347
        %398 = vmatprep.subr.mxu0 %v345
        %399 = vmatpush1.xpose.msra.mxu0 %v344
        %400 = vmatprep.subr.mxu0 %v342
        %401 = vmatpush1.xpose.msra.mxu0 %v341
        %402 = vmatprep.subr.mxu0 %v339
        %403 = vmatpush1.xpose.msra.mxu0 %v338
        %404 = vmatprep.subr.mxu0 %v336
        %405 = vmatpush1.xpose.msra.mxu0 %v335
        %406 = vmatprep.subr.mxu0 %v333
        %407 = vmatpush1.xpose.msra.mxu0 %v332
        %408 = vmatprep.subr.mxu0 %v330
        %409 = vmatpush1.xpose.msra.mxu0 %v329
        %410 = vmatprep.subr.mxu0 %v327
        %411 = vmatpush1.xpose.msra.mxu0 %v326
        %412 = vmatprep.subr.mxu0 %v324
        %413 = vmatpush1.xpose.msra.mxu0 %v323
        %414 = vmatprep.subr.mxu0 %v321
        %415 = vmatpush1.xpose.msra.mxu0 %v320
        %416 = vmatprep.subr.mxu0 0.0
        %417 = vmatpush2.xpose.msra.mxu0 0.0
        %418 = vmatprep.subr.mxu0 0.0
        %419 = vmatpush2.xpose.msra.mxu0 0.0
        %420 = vmatprep.subr.mxu0 0.0
        %421 = vmatpush2.xpose.msra.mxu0 0.0
        %422 = vmatprep.subr.mxu0 0.0
        %423 = vmatpush2.xpose.msra.mxu0 0.0
        %424 = vmatprep.subr.mxu0 0.0
        %425 = vmatpush2.xpose.msra.mxu0 0.0
        %426 = vmatprep.subr.mxu0 0.0
        %427 = vmatpush2.xpose.msra.mxu0 0.0
        %428 = vmatprep.subr.mxu0 0.0
        %429 = vmatpush2.xpose.msra.mxu0 0.0
        %430 = vmatprep.subr.mxu0 0.0
        %431 = vmatpush2.xpose.msra.mxu0 0.0
        %432 = vmatprep.subr.mxu0 0.0
        %433 = vmatpush2.xpose.msra.mxu0 0.0
        %434 = vmatprep.subr.mxu0 0.0
        %435 = vmatpush2.xpose.msra.mxu0 0.0
        %436 = vmatprep.subr.mxu0 0.0
        %437 = vmatpush2.xpose.msra.mxu0 0.0
        %438 = vmatprep.subr.mxu0 0.0
        %439 = vmatpush2.xpose.msra.mxu0 0.0
        %440 = vmatprep.subr.mxu0 0.0
        %441 = vmatpush2.xpose.msra.mxu0 0.0
        %442 = vmatprep.subr.mxu0 0.0
        %443 = vmatpush2.xpose.msra.mxu0 0.0
        %444 = vmatprep.subr.mxu0 0.0
        %445 = vmatpush2.xpose.msra.mxu0 0.0
        %446 = vmatprep.subr.mxu0 0.0
        %447 = vmatpush2.xpose.msra.mxu0 0.0
        %448 = vmatprep.mubr.f32.mxu0 %v376
        %449 = vmatmul.mubr.f32.gmra.mxu0 %v372
        %v450 = vpop.f32.mrf.mxu0
        %v451 = vadd.f32 0.0, %v450
        %v452 = vpop.f32.mrf.mxu0
        %453 = vdwg.mxu0
        %454 = vmatprep.subr.mxu0 0.0
        %455 = vmatpush1.xpose.msra.mxu0 %v367
        %456 = vmatprep.subr.mxu0 0.0
        %457 = vmatpush1.xpose.msra.mxu0 %v364
        %458 = vmatprep.subr.mxu0 0.0
        %459 = vmatpush1.xpose.msra.mxu0 %v361
        %460 = vmatprep.subr.mxu0 0.0
        %461 = vmatpush1.xpose.msra.mxu0 %v358
        %462 = vmatprep.subr.mxu0 0.0
        %463 = vmatpush1.xpose.msra.mxu0 %v355
        %464 = vmatprep.subr.mxu0 0.0
        %465 = vmatpush1.xpose.msra.mxu0 %v352
        %466 = vmatprep.subr.mxu0 0.0
        %467 = vmatpush1.xpose.msra.mxu0 %v349
        %468 = vmatprep.subr.mxu0 0.0
        %469 = vmatpush1.xpose.msra.mxu0 %v346
        %470 = vmatprep.subr.mxu0 0.0
        %471 = vmatpush1.xpose.msra.mxu0 %v343
        %472 = vmatprep.subr.mxu0 0.0
        %473 = vmatpush1.xpose.msra.mxu0 %v340
        %474 = vmatprep.subr.mxu0 0.0
        %475 = vmatpush1.xpose.msra.mxu0 %v337
        %476 = vmatprep.subr.mxu0 0.0
        %477 = vmatpush1.xpose.msra.mxu0 %v334
        %478 = vmatprep.subr.mxu0 0.0
        %479 = vmatpush1.xpose.msra.mxu0 %v331
        %480 = vmatprep.subr.mxu0 0.0
        %481 = vmatpush1.xpose.msra.mxu0 %v328
        %482 = vmatprep.subr.mxu0 0.0
        %483 = vmatpush1.xpose.msra.mxu0 %v325
        %484 = vmatprep.subr.mxu0 0.0
        %485 = vmatpush1.xpose.msra.mxu0 %v322
        %486 = vmatprep.subr.mxu0 0.0
        %487 = vmatpush2.xpose.msra.mxu0 0.0
        %488 = vmatprep.subr.mxu0 0.0
        %489 = vmatpush2.xpose.msra.mxu0 0.0
        %490 = vmatprep.subr.mxu0 0.0
        %491 = vmatpush2.xpose.msra.mxu0 0.0
        %492 = vmatprep.subr.mxu0 0.0
        %493 = vmatpush2.xpose.msra.mxu0 0.0
        %494 = vmatprep.subr.mxu0 0.0
        %495 = vmatpush2.xpose.msra.mxu0 0.0
        %496 = vmatprep.subr.mxu0 0.0
        %497 = vmatpush2.xpose.msra.mxu0 0.0
        %498 = vmatprep.subr.mxu0 0.0
        %499 = vmatpush2.xpose.msra.mxu0 0.0
        %500 = vmatprep.subr.mxu0 0.0
        %501 = vmatpush2.xpose.msra.mxu0 0.0
        %502 = vmatprep.subr.mxu0 0.0
        %503 = vmatpush2.xpose.msra.mxu0 0.0
        %504 = vmatprep.subr.mxu0 0.0
        %505 = vmatpush2.xpose.msra.mxu0 0.0
        %506 = vmatprep.subr.mxu0 0.0
        %507 = vmatpush2.xpose.msra.mxu0 0.0
        %508 = vmatprep.subr.mxu0 0.0
        %509 = vmatpush2.xpose.msra.mxu0 0.0
        %510 = vmatprep.subr.mxu0 0.0
        %511 = vmatpush2.xpose.msra.mxu0 0.0
        %512 = vmatprep.subr.mxu0 0.0
        %513 = vmatpush2.xpose.msra.mxu0 0.0
        %514 = vmatprep.subr.mxu0 0.0
        %515 = vmatpush2.xpose.msra.mxu0 0.0
        %516 = vmatprep.subr.mxu0 0.0
        %517 = vmatpush2.xpose.msra.mxu0 0.0
        %518 = vmatprep.mubr.f32.mxu0 0.0
        %519 = vmatmul.mubr.f32.gmra.mxu0 %v380
        %v520 = vpop.f32.mrf.mxu0
        %v521 = vadd.f32 %v451, %v520
        %v522 = vpop.f32.mrf.mxu0
        %523 = vdwg.mxu0
        %v524 = vmul.f32 %v521, 0.125
        %s525 = sld [smem:[#allocation5]]
        %v526 = vstv %s525
        %v527 = vadd.f32 %v524, %v526
        %528 = vst [vmem:[%s168] sm:$0x1] %v527
        %s529 = sand.u32 %s95, 1
        %s530 = scalar_lea.sflag [#allocation8], %s529
        %s531 = sand.u32 %s95, 1
        %s532 = scalar_lea.vmem [#allocation9], %s531
        // Predicated region
        $region44: #{tpu_custom_call.1} parent=31 // pred_check
          %p533 = pneg %p105
        $region45: #{tpu_custom_call.1} parent=31 // pred_check_branch
          %535 = sbr.rel (%p533) target = $region47
        $region46: #{tpu_custom_call.1} parent=31 // pred_region
          %s537 = ssub.s32 16, 16
          %538 = vsyncadd %s530, %s537
          %s539 = smul.addr %s24, 16
          %s540 = scalar_lea.hbm %s4, %s539
          %s542 = sshll.u32 %s532, 4
          %s543 = int_to_ptr.vmem [resolvable:$true] %s542
          %545 = dma.vmem_to_hbm [thread:$0]  %s543, 16, %s540, %s530
        $region47: #{tpu_custom_call.1} parent=31 // pred_fallthru
          _
      $region32: #{tpu_custom_call.1} parent=5 // pred_fallthru
        _
      %p546 = scmp.le.s32.totalorder 2, %s19
      // Predicated region
      $region48: #{tpu_custom_call.1} parent=5 // pred_check
        %p547 = pneg %p546
      $region49: #{tpu_custom_call.1} parent=5 // pred_check_branch
        %549 = sbr.rel (%p547) target = $region51
      $region50: #{tpu_custom_call.1} parent=5 // pred_region
        %s550 = ssub.s32 %s19, 2
        // Predicated region
        $region52: #{tpu_custom_call.1} parent=50 // pred_check
          %p551 = pneg %p111
        $region53: #{tpu_custom_call.1} parent=50 // pred_check_branch
          %553 = sbr.rel (%p551) target = $region55
        $region54: #{tpu_custom_call.1} parent=50 // pred_region
          %s554 = sand.u32 %s96, 1
          %s555 = scalar_lea.sflag [#allocation8], %s554
          %s556 = sand.u32 %s96, 1
          %s557 = scalar_lea.vmem [#allocation9], %s556
          %558 = dma.done %s555, 16
        $region55: #{tpu_custom_call.1} parent=50 // pred_fallthru
          _
      $region51: #{tpu_custom_call.1} parent=5 // pred_fallthru
        _
    $region6: #{tpu_custom_call.1} parent=1 // loop_footer
      %s23 = sadd.s32 1, %s19
    $region7: #{tpu_custom_call.1} parent=1 // loop_footer_branch
      %18 = sbr.rel target = $region3
    $region8: #{tpu_custom_call.1} parent=1 // loop_exit
      _
    %559 = vsyncpa [#allocation7], 1
    %s560 = scalar_lea.sflag [#allocation7], 1
    %561 = vsyncpa %s560, 1
    %562 = vsyncpa [#allocation8], 1
    %s563 = scalar_lea.sflag [#allocation8], 1
    %564 = vsyncpa %s563, 1

</llo_original>
